<compile_context>
chip_gen: v7x
topology: tpu7x:2x2x1
jax: 0.10.0
libtpu: 0.0.40
codegen_flags: <defaults>
</compile_context>

<pallas_src>
import math

import jax
import jax.numpy as jnp
from jax.experimental import pallas as pl
from jax.experimental.pallas import tpu as pltpu


_VMEM_LIMIT = pltpu.CompilerParams(vmem_limit_bytes=32 * 1024 * 1024)


# --------------------------- Pallas kernels ---------------------------------

def _gemm_bias_kernel(b_ref, a_ref, bias_ref, o_ref):
    # b: (Cout, Kd) bf16, a: (Kd, M) bf16, bias: (Cout, 1) f32 -> (Cout, M) f32
    y = jnp.dot(b_ref[...], a_ref[...], preferred_element_type=jnp.float32)
    o_ref[...] = y + bias_ref[...]


def _gemm_bias_bn_relu_kernel(b_ref, a_ref, bias_ref, gamma_ref, beta_ref, o_ref):
    # Fused conv(GEMM) + bias + BatchNorm2d(training, batch stats) + ReLU.
    # Output is (Cout, M) with the long M axis on lanes (unmasked vst).
    y = jnp.dot(b_ref[...], a_ref[...], preferred_element_type=jnp.float32)
    y = y + bias_ref[...]
    mean = jnp.mean(y, axis=1, keepdims=True)                 # per-channel
    var = jnp.mean((y - mean) ** 2, axis=1, keepdims=True)    # biased variance
    scale = gamma_ref[...] * jax.lax.rsqrt(var + 1e-5)
    y = (y - mean) * scale + beta_ref[...]
    o_ref[...] = jnp.maximum(y, 0.0)


def pallas_gemm_bias(bT, aT, bias):
    Cout, Kd = bT.shape
    M = aT.shape[1]
    return pl.pallas_call(
        _gemm_bias_kernel,
        out_shape=jax.ShapeDtypeStruct((Cout, M), jnp.float32),
        grid=(1,),
        in_specs=[pl.BlockSpec((Cout, Kd), lambda i: (0, 0)),
                  pl.BlockSpec((Kd, M), lambda i: (0, 0)),
                  pl.BlockSpec((Cout, 1), lambda i: (0, 0))],
        out_specs=pl.BlockSpec((Cout, M), lambda i: (0, 0)),
        compiler_params=_VMEM_LIMIT,
    )(bT, aT, bias.reshape(Cout, 1))


def pallas_gemm_bias_bn_relu(bT, aT, bias, gamma, beta):
    Cout, Kd = bT.shape
    M = aT.shape[1]
    return pl.pallas_call(
        _gemm_bias_bn_relu_kernel,
        out_shape=jax.ShapeDtypeStruct((Cout, M), jnp.float32),
        grid=(1,),
        in_specs=[pl.BlockSpec((Cout, Kd), lambda i: (0, 0)),
                  pl.BlockSpec((Kd, M), lambda i: (0, 0)),
                  pl.BlockSpec((Cout, 1), lambda i: (0, 0)),
                  pl.BlockSpec((Cout, 1), lambda i: (0, 0)),
                  pl.BlockSpec((Cout, 1), lambda i: (0, 0))],
        out_specs=pl.BlockSpec((Cout, M), lambda i: (0, 0)),
        compiler_params=_VMEM_LIMIT,
    )(bT, aT, bias.reshape(Cout, 1), gamma.reshape(Cout, 1),
      beta.reshape(Cout, 1))


def _vq_kernel(z_ref, w_ref, q_ref, loss_ref):
    z = z_ref[...]                                   # (M, D) f32
    w = w_ref[...]                                   # (K, D) f32
    M, D = z.shape
    K = w.shape[0]
    nt = (((1,), (1,)), ((), ()))                    # contract last dims (MXU)
    zw = jax.lax.dot_general(z, w, nt, preferred_element_type=jnp.float32)
    ww = jax.lax.dot_general(jnp.ones((1, D), jnp.float32), w * w, nt,
                             preferred_element_type=jnp.float32)   # (1, K)
    # ||z-w||^2 = ||z||^2 + ||w||^2 - 2 z.w ; drop the per-row ||z||^2 constant
    # (same argmin / same tie-break as torch .min(1)[1]).
    score = ww - 2.0 * zw                            # (M, K)
    mins = jnp.min(score, axis=1, keepdims=True)
    kidx = jax.lax.broadcasted_iota(jnp.float32, (M, K), 1)
    j = jnp.min(jnp.where(score <= mins, kidx, float(K)), axis=1, keepdims=True)
    onehot = (kidx == j).astype(jnp.float32)         # first index at minimum
    q = jnp.dot(onehot, w, preferred_element_type=jnp.float32)     # gather W[j]
    q_ref[...] = q
    per_row = jnp.sum((z - q) ** 2, axis=1, keepdims=True)         # sum over D
    loss_ref[...] = jnp.sum(per_row, axis=0, keepdims=True) * (1.0 / M)


def pallas_vq(z, codebook):
    M, D = z.shape
    K = codebook.shape[0]
    q, loss = pl.pallas_call(
        _vq_kernel,
        out_shape=(jax.ShapeDtypeStruct((M, D), jnp.float32),
                   jax.ShapeDtypeStruct((1, 1), jnp.float32)),
        grid=(1,),
        in_specs=[pl.BlockSpec((M, D), lambda i: (0, 0)),
                  pl.BlockSpec((K, D), lambda i: (0, 0))],
        out_specs=(pl.BlockSpec((M, D), lambda i: (0, 0)),
                   pl.BlockSpec((1, 1), lambda i: (0, 0))),
        compiler_params=_VMEM_LIMIT,
    )(z, codebook)
    return q, loss[0, 0]


# --------------------------- conv glue (im2col) ------------------------------

def _im2col_T(x, KH, KW, stride, padding):
    """A^T with shape (Cin*KH*KW, N*Ho*Wo); rows ordered (ci,kh,kw), columns
    ordered (n,ho,wo).  Matches w.reshape(Cout, Cin*KH*KW)."""
    N, Cin, H, W = x.shape
    Hout = (H + 2 * padding - KH) // stride + 1
    Wout = (W + 2 * padding - KW) // stride + 1
    xp = jnp.pad(x, ((0, 0), (0, 0), (padding, padding), (padding, padding)))
    cols = []
    for kh in range(KH):
        for kw in range(KW):
            cols.append(xp[:, :,
                           kh:kh + stride * (Hout - 1) + 1:stride,
                           kw:kw + stride * (Wout - 1) + 1:stride])
    p = jnp.stack(cols, axis=0).reshape(KH, KW, N, Cin, Hout, Wout)
    p = p.transpose(3, 0, 1, 2, 4, 5)                   # (Cin,KH,KW,N,Ho,Wo)
    return p.reshape(Cin * KH * KW, N * Hout * Wout), (N, Hout, Wout)


def _apply_layer(x_nchw, layer):
    p = layer['p']
    if layer['type'] == 'conv':
        x = x_nchw
        w = p['w']                                       # (Cout, Cin, KH, KW)
        stride, pad = layer['stride'], layer['pad']
    else:
        # ConvTranspose2d == conv(dilate_s(x) pad (K-1-p), flipped/swapped kernel)
        # TODO(synk): a stride^2 sub-pixel phase split would avoid the
        # zero-dilated input (~4x wasted MXU FLOPs at stride=2).
        N, Cin, H, W = x_nchw.shape
        s = layer['stride']
        if s > 1:
            x = jnp.zeros((N, Cin, (H - 1) * s + 1, (W - 1) * s + 1),
                          x_nchw.dtype).at[:, :, ::s, ::s].set(x_nchw)
        else:
            x = x_nchw
        w = jnp.flip(p['w'], axis=(2, 3)).transpose(1, 0, 2, 3)  # (Cout,Cin,KH,KW)
        stride, pad = 1, p['w'].shape[2] - 1 - layer['pad']

    KH, KW = w.shape[2], w.shape[3]
    Cout = w.shape[0]
    aT, (N, Ho, Wo) = _im2col_T(x, KH, KW, stride, pad)
    bT = w.reshape(Cout, -1)
    # bf16 MXU operands, f32 accumulation + f32 BN/ReLU epilogue.
    aT16 = aT.astype(jnp.bfloat16)
    bT16 = bT.astype(jnp.bfloat16)
    if layer['bn']:
        out_T = pallas_gemm_bias_bn_relu(bT16, aT16, p['b'], p['gamma'], p['beta'])
    else:
        out_T = pallas_gemm_bias(bT16, aT16, p['b'])
    # (Cout, N*Ho*Wo) -> NCHW
    return out_T.reshape(Cout, N, Ho, Wo).transpose(1, 0, 2, 3)


# --------------------------- Generator (VQ-VAE) ------------------------------

def build_generator_params(key, image_size=16, z_dim=32, conv_dim=8,
                           code_dim=4, k_dim=16):
    repeat_num = int(math.log2(image_size / code_dim))

    def make_layer(key, ltype, cin, cout, k, stride, pad, bn):
        kw, kb, key = jax.random.split(key, 3)
        s = 1.0 / math.sqrt(cin * k * k)
        wshape = (cout, cin, k, k) if ltype == 'conv' else (cin, cout, k, k)
        p = {'w': jax.random.uniform(kw, wshape, jnp.float32, -s, s),
             'b': jax.random.uniform(kb, (cout,), jnp.float32, -s, s)}
        if bn:
            p['gamma'] = jnp.ones((cout,), jnp.float32)
            p['beta'] = jnp.zeros((cout,), jnp.float32)
        return {'type': ltype, 'stride': stride, 'pad': pad, 'bn': bn, 'p': p}, key

    encoder = []
    layer, key = make_layer(key, 'conv', 3, conv_dim, 3, 1, 1, True)
    encoder.append(layer)
    curr = conv_dim
    for i in range(repeat_num):
        layer, key = make_layer(key, 'conv', curr, conv_dim * (i + 2), 4, 2, 1, True)
        encoder.append(layer)
        curr = conv_dim * (i + 2)
    layer, key = make_layer(key, 'conv', curr, z_dim, 1, 1, 0, False)
    encoder.append(layer)

    decoder = []
    layer, key = make_layer(key, 'convT', z_dim, curr, 1, 1, 0, True)
    decoder.append(layer)
    for i in reversed(range(repeat_num)):
        layer, key = make_layer(key, 'convT', curr, conv_dim * (i + 1), 4, 2, 1, True)
        decoder.append(layer)
        curr = conv_dim * (i + 1)
    layer, key = make_layer(key, 'conv', curr, 3, 3, 1, 1, False)
    decoder.append(layer)

    kd, key = jax.random.split(key)
    dict_w = jax.random.uniform(kd, (k_dim, z_dim), jnp.float32,
                                -1.0 / k_dim, 1.0 / k_dim)
    return {'encoder': encoder, 'decoder': decoder, 'dict': dict_w}


def generator_forward(params, x):
    h = x
    for layer in params['encoder']:
        h = _apply_layer(h, layer)
    N, C, Hh, Wh = h.shape                          # C == z_dim
    Z = h.transpose(0, 2, 3, 1).reshape(-1, C)      # (N*Hh*Wh, z_dim)
    q, vq_loss = pallas_vq(Z, params['dict'])       # nearest codeword + loss
    hq = q.reshape(N, Hh, Wh, C).transpose(0, 3, 1, 2)
    out = hq
    for layer in params['decoder']:
        out = _apply_layer(out, layer)
    # Both commitment-loss terms are numerically identical in the forward pass
    # (detach() only changes gradients).
    # TODO(synk): register_hook / .bwd() straight-through gradient plumbing is
    # autograd-only and has no forward-pass Pallas equivalent.
    return out, vq_loss, vq_loss


# --------------------------------- main --------------------------------------

if __name__ == "__main__":
    key = jax.random.PRNGKey(0)
    pkey, xkey = jax.random.split(key)
    # Small config consistent with the module: image_size=16, code_dim=4
    # -> repeat_num = 2, conv_dim=8, z_dim=32, k_dim=16, batch=2.
    params = build_generator_params(pkey, image_size=16, z_dim=32, conv_dim=8,
                                    code_dim=4, k_dim=16)
    x = jax.random.normal(xkey, (2, 3, 16, 16), dtype=jnp.float32)
    out, loss1, loss2 = generator_forward(params, x)
    jax.block_until_ready((out, loss1, loss2))
    assert out.shape == (2, 3, 16, 16)
    assert out.dtype == jnp.float32
    print("KERNEL_OK")
</pallas_src>

<mosaic_0001>
module attributes {stable_mosaic.version = 11 : i64} {
  func.func @_gemm_bias_bn_relu_kernel(%arg0: i32, %arg1: memref<8x27xbf16, #tpu.memory_space<vmem>>, %arg2: memref<27x512xbf16, #tpu.memory_space<vmem>>, %arg3: memref<8x1xf32, #tpu.memory_space<vmem>>, %arg4: memref<8x1xf32, #tpu.memory_space<vmem>>, %arg5: memref<8x1xf32, #tpu.memory_space<vmem>>, %arg6: memref<8x512xf32, #tpu.memory_space<vmem>>) attributes {dimension_semantics = [#tpu.dimension_semantics<arbitrary>], iteration_bounds = array<i64: 1>, scalar_prefetch = 0 : i64, scratch_operands = 0 : i64, tpu.core_type = #tpu.core_type<tc>, window_params = [{pipeline_mode = #tpu.pipeline_mode<synchronous>, transform_indices = @transform_0, window_bounds = array<i64: 8, 27>}, {pipeline_mode = #tpu.pipeline_mode<synchronous>, transform_indices = @transform_1, window_bounds = array<i64: 27, 512>}, {pipeline_mode = #tpu.pipeline_mode<synchronous>, transform_indices = @transform_2, window_bounds = array<i64: 8, 1>}, {pipeline_mode = #tpu.pipeline_mode<synchronous>, transform_indices = @transform_3, window_bounds = array<i64: 8, 1>}, {pipeline_mode = #tpu.pipeline_mode<synchronous>, transform_indices = @transform_4, window_bounds = array<i64: 8, 1>}, {pipeline_mode = #tpu.pipeline_mode<synchronous>, transform_indices = @transform_5, window_bounds = array<i64: 8, 512>}]} {
    %c0 = arith.constant 0 : index
    %c0_0 = arith.constant 0 : index
    %0 = vector.load %arg1[%c0, %c0_0] : memref<8x27xbf16, #tpu.memory_space<vmem>>, vector<8x27xbf16>
    %c0_1 = arith.constant 0 : index
    %c0_2 = arith.constant 0 : index
    %1 = vector.load %arg2[%c0_1, %c0_2] : memref<27x512xbf16, #tpu.memory_space<vmem>>, vector<27x512xbf16>
    %cst = arith.constant dense<0.000000e+00> : vector<8x512xf32>
    %2 = tpu.matmul %0, %1, %cst {dimension_numbers = #tpu.dot_dimension_numbers<[1], [0], [0], [1], [0, 0, 1, 1], [], []>} : vector<8x27xbf16>, vector<27x512xbf16>, vector<8x512xf32> -> vector<8x512xf32>
    %c0_3 = arith.constant 0 : index
    %c0_4 = arith.constant 0 : index
    %3 = vector.load %arg3[%c0_3, %c0_4] : memref<8x1xf32, #tpu.memory_space<vmem>>, vector<8x1xf32>
    %4 = vector.broadcast %3 : vector<8x1xf32> to vector<8x512xf32>
    %5 = arith.addf %2, %4 : vector<8x512xf32>
    %cst_5 = arith.constant dense<0.000000e+00> : vector<8xf32>
    %6 = vector.multi_reduction <add>, %5, %cst_5 [1] : vector<8x512xf32> to vector<8xf32>
    %7 = vector.shape_cast %6 : vector<8xf32> to vector<8x1xf32>
    %cst_6 = arith.constant 5.120000e+02 : f32
    %8 = vector.broadcast %cst_6 : f32 to vector<8x1xf32>
    %9 = arith.divf %7, %8 : vector<8x1xf32>
    %10 = vector.broadcast %9 : vector<8x1xf32> to vector<8x512xf32>
    %11 = arith.subf %5, %10 : vector<8x512xf32>
    %12 = arith.mulf %11, %11 : vector<8x512xf32>
    %cst_7 = arith.constant dense<0.000000e+00> : vector<8xf32>
    %13 = vector.multi_reduction <add>, %12, %cst_7 [1] : vector<8x512xf32> to vector<8xf32>
    %14 = vector.shape_cast %13 : vector<8xf32> to vector<8x1xf32>
    %cst_8 = arith.constant 5.120000e+02 : f32
    %15 = vector.broadcast %cst_8 : f32 to vector<8x1xf32>
    %16 = arith.divf %14, %15 : vector<8x1xf32>
    %c0_9 = arith.constant 0 : index
    %c0_10 = arith.constant 0 : index
    %17 = vector.load %arg4[%c0_9, %c0_10] : memref<8x1xf32, #tpu.memory_space<vmem>>, vector<8x1xf32>
    %cst_11 = arith.constant 9.99999974E-6 : f32
    %18 = vector.broadcast %cst_11 : f32 to vector<8x1xf32>
    %19 = arith.addf %16, %18 : vector<8x1xf32>
    %20 = math.rsqrt %19 : vector<8x1xf32>
    %21 = arith.mulf %17, %20 : vector<8x1xf32>
    %22 = vector.broadcast %9 : vector<8x1xf32> to vector<8x512xf32>
    %23 = arith.subf %5, %22 : vector<8x512xf32>
    %24 = vector.broadcast %21 : vector<8x1xf32> to vector<8x512xf32>
    %25 = arith.mulf %23, %24 : vector<8x512xf32>
    %c0_12 = arith.constant 0 : index
    %c0_13 = arith.constant 0 : index
    %26 = vector.load %arg5[%c0_12, %c0_13] : memref<8x1xf32, #tpu.memory_space<vmem>>, vector<8x1xf32>
    %27 = vector.broadcast %26 : vector<8x1xf32> to vector<8x512xf32>
    %28 = arith.addf %25, %27 : vector<8x512xf32>
    %cst_14 = arith.constant 0.000000e+00 : f32
    %29 = vector.broadcast %cst_14 : f32 to vector<8x512xf32>
    %30 = arith.maximumf %28, %29 : vector<8x512xf32>
    %c0_15 = arith.constant 0 : index
    %c0_16 = arith.constant 0 : index
    %31 = vector.load %arg6[%c0_15, %c0_16] : memref<8x512xf32, #tpu.memory_space<vmem>>, vector<8x512xf32>
    tpu.vector_store %arg6[%c0_15, %c0_16], %30 {strides = array<i32>} : memref<8x512xf32, #tpu.memory_space<vmem>>, vector<8x512xf32>,
    return
  }
  func.func @transform_0(%arg0: i32) -> (i32, i32) {
    %c0_i32 = arith.constant 0 : i32
    %c0_i32_0 = arith.constant 0 : i32
    %c0_i32_1 = arith.constant 0 : i32
    return %c0_i32, %c0_i32_0 : i32, i32
  }
  func.func @transform_1(%arg0: i32) -> (i32, i32) {
    %c0_i32 = arith.constant 0 : i32
    %c0_i32_0 = arith.constant 0 : i32
    %c0_i32_1 = arith.constant 0 : i32
    return %c0_i32, %c0_i32_0 : i32, i32
  }
  func.func @transform_2(%arg0: i32) -> (i32, i32) {
    %c0_i32 = arith.constant 0 : i32
    %c0_i32_0 = arith.constant 0 : i32
    %c0_i32_1 = arith.constant 0 : i32
    return %c0_i32, %c0_i32_0 : i32, i32
  }
  func.func @transform_3(%arg0: i32) -> (i32, i32) {
    %c0_i32 = arith.constant 0 : i32
    %c0_i32_0 = arith.constant 0 : i32
    %c0_i32_1 = arith.constant 0 : i32
    return %c0_i32, %c0_i32_0 : i32, i32
  }
  func.func @transform_4(%arg0: i32) -> (i32, i32) {
    %c0_i32 = arith.constant 0 : i32
    %c0_i32_0 = arith.constant 0 : i32
    %c0_i32_1 = arith.constant 0 : i32
    return %c0_i32, %c0_i32_0 : i32, i32
  }
  func.func @transform_5(%arg0: i32) -> (i32, i32) {
    %c0_i32 = arith.constant 0 : i32
    %c0_i32_0 = arith.constant 0 : i32
    %c0_i32_1 = arith.constant 0 : i32
    return %c0_i32, %c0_i32_0 : i32, i32
  }
}

</mosaic_0001>

<llo_original>
// kernel: tpu_custom_call.1
$region0: #{tpu_custom_call.1}
  #allocation0 [shape = 'u32[]', space=smem, size = 0x4, offset = 0x4, fixed_abs, tag = 'smem constant byte address 0x4 - core index']
  #allocation1 [shape = 'u32[144,128]{1,0:T(1,128)}', space=vmem, size = 0x12000, scoped, tag = 'internal scratch']
  %s0 = inlined_call_operand.vmem [shape: bf16[8,27], index: 0, kind: input, shape index: {}]
  %s1 = inlined_call_operand.hbm [shape: bf16[27,512], index: 1, kind: input, shape index: {}]
  %s2 = inlined_call_operand.vmem [shape: f32[8,1], index: 2, kind: input, shape index: {}]
  %s3 = inlined_call_operand.vmem [shape: f32[8,1], index: 3, kind: input, shape index: {}]
  %s4 = inlined_call_operand.vmem [shape: f32[8,1], index: 4, kind: input, shape index: {}]
  %s5 = inlined_call_operand.hbm [shape: f32[8,512], index: 5, kind: output, shape index: {}]
  %s6 = sld [smem:[#allocation0]]
  $region34: #{tpu_custom_call.1} parent=0
    _
  %s8 = ssub.s32 1, %s6
  %s9 = scalar_select 0, %s8, %s6
  $region1: #{tpu_custom_call.1} parent=0
    #allocation2 [shape = 'u8[32768]{0}', space=vmem, size = 0x8000, scoped, tag = 'input window, operand 1, single buffered']
    #allocation3 [shape = 's32[1]{0}', space=sflag, size = 0x4, scoped, tag = 'scoped memory for tpu_custom_call.1']
    #allocation4 [shape = 's32[1]{0}', space=sflag, size = 0x4, scoped, tag = 'scoped memory for tpu_custom_call.1']
    #allocation5 [shape = 'u8[16384]{0}', space=vmem, size = 0x4000, scoped, tag = 'output window, operand 0, single buffered']
    %10 = vsyncpa [#allocation3], 0
    %11 = vsyncpa [#allocation4], 0
    // Predicated region
    $region2: #{tpu_custom_call.1} parent=1 // pred_check
      _
    $region3: #{tpu_custom_call.1} parent=1 // pred_check_branch
      %13 = sbr.rel (0) target = $region5
    $region4: #{tpu_custom_call.1} parent=1 // pred_region
      _
    $region5: #{tpu_custom_call.1} parent=1 // pred_fallthru
      _
    // Predicated region
    $region6: #{tpu_custom_call.1} parent=1 // pred_check
      _
    $region7: #{tpu_custom_call.1} parent=1 // pred_check_branch
      %15 = sbr.rel (0) target = $region9
    $region8: #{tpu_custom_call.1} parent=1 // pred_region
      %s17 = ssub.s32 1024, 1024
      %18 = vsyncadd [#allocation3], %s17
      %s19 = sshll.u32 [#allocation2], 4
      %s20 = int_to_ptr.vmem [resolvable:$true] %s19
      %25 = dma.hbm_to_vmem [thread:$0]  %s1, 1024, %s20, [#allocation3], 256, 256, 16
    $region9: #{tpu_custom_call.1} parent=1 // pred_fallthru
      _
    // Predicated region
    $region10: #{tpu_custom_call.1} parent=1 // pred_check
      _
    $region11: #{tpu_custom_call.1} parent=1 // pred_check_branch
      %27 = sbr.rel (0) target = $region13
    $region12: #{tpu_custom_call.1} parent=1 // pred_region
      _
    $region13: #{tpu_custom_call.1} parent=1 // pred_fallthru
      _
    // Predicated region
    $region14: #{tpu_custom_call.1} parent=1 // pred_check
      _
    $region15: #{tpu_custom_call.1} parent=1 // pred_check_branch
      %29 = sbr.rel (0) target = $region17
    $region16: #{tpu_custom_call.1} parent=1 // pred_region
      _
    $region17: #{tpu_custom_call.1} parent=1 // pred_fallthru
      _
    // Predicated region
    $region18: #{tpu_custom_call.1} parent=1 // pred_check
      _
    $region19: #{tpu_custom_call.1} parent=1 // pred_check_branch
      %31 = sbr.rel (0) target = $region21
    $region20: #{tpu_custom_call.1} parent=1 // pred_region
      _
    $region21: #{tpu_custom_call.1} parent=1 // pred_fallthru
      _
    // Predicated region
    $region22: #{tpu_custom_call.1} parent=1 // pred_check
      _
    $region23: #{tpu_custom_call.1} parent=1 // pred_check_branch
      %33 = sbr.rel (0) target = $region25
    $region24: #{tpu_custom_call.1} parent=1 // pred_region
      %34 = dma.done [#allocation3], 1024
    $region25: #{tpu_custom_call.1} parent=1 // pred_fallthru
      _
    %v36 = vld [vmem:[%s0] sm:$0xf]
    %v37 = vld [vmem:[#allocation2] sm:$0xff]
    %v38 = vld [vmem:[#allocation2 + $0x8] sm:$0xff]
    %v39 = vld [vmem:[#allocation2 + $0x10] sm:$0xff]
    %v40 = vld [vmem:[#allocation2 + $0x18] sm:$0xff]
    %v41 = vld [vmem:[#allocation2 + $0x20] sm:$0xff]
    %v42 = vld [vmem:[#allocation2 + $0x28] sm:$0xff]
    %v43 = vld [vmem:[#allocation2 + $0x30] sm:$0x33]
    %v44 = vld [vmem:[#allocation2 + $0x38] sm:$0x33]
    %v45 = vld [vmem:[%s2] sm:$0xff]
    %47 = vset.pattern.permute.xlu0 0
    %48 = vperm.xlu0 %47, %v45
    %v49 = vpop.permute.xlu0 %48
    %v59 = vunpack.c.l.b16 %v37
    %v60 = vunpack.c.h.b16 %v37
    %v61 = vunpack.c.l.b16 %v38
    %v62 = vunpack.c.h.b16 %v38
    %v63 = vunpack.c.l.b16 %v39
    %v64 = vunpack.c.h.b16 %v39
    %v65 = vunpack.c.l.b16 %v40
    %v66 = vunpack.c.h.b16 %v40
    %v67 = vunpack.c.l.b16 %v41
    %v68 = vunpack.c.h.b16 %v41
    %v69 = vunpack.c.l.b16 %v42
    %v70 = vunpack.c.h.b16 %v42
    %v71 = vunpack.c.l.b16 %v43
    %v72 = vunpack.c.h.b16 %v43
    %v73 = vunpack.c.l.b16 %v44
    %v74 = vunpack.c.h.b16 %v44
    %v75 = vpack.c.b16 %v63, %v59
    %v76 = vpack.c.b16 %v64, %v60
    %v77 = vpack.c.b16 %v65, %v61
    %v78 = vpack.c.b16 %v66, %v62
    %v79 = vpack.c.b16 %v71, %v67
    %v80 = vpack.c.b16 %v72, %v68
    %v81 = vpack.c.b16 %v73, %v69
    %v82 = vpack.c.b16 %v74, %v70
    %vm87 = vcmask 220160
    %v89 = vsel %vm87, %v36, 0
    %vm91 = vcmask 1044480
    %vm92 = vcmask 1045504
    %v93 = vsel %vm91, 4294967295, 65535
    %v94 = vsel %vm92, %v93, 0
    %v96 = vand.u32 %v79, %v94
    %v99 = vand.u32 %v80, %v94
    %v102 = vand.u32 %v81, %v94
    %v105 = vand.u32 %v82, %v94
    %107 = vmatprep.subr.bf16.mxu0 %v76
    %108 = vmatpush1.bf16.msra.mxu0 %v75
    %109 = vmatprep.subr.bf16.mxu0 %v99
    %110 = vmatpush1.bf16.msra.mxu0 %v96
    %111 = vmatprep.subr.bf16.mxu0 0
    %112 = vmatpush1.bf16.msra.mxu0 0
    %113 = vmatprep.subr.bf16.mxu0 0
    %114 = vmatpush1.bf16.msra.mxu0 0
    %115 = vmatprep.subr.bf16.mxu0 0
    %116 = vmatpush1.bf16.msra.mxu0 0
    %117 = vmatprep.subr.bf16.mxu0 0
    %118 = vmatpush1.bf16.msra.mxu0 0
    %119 = vmatprep.subr.bf16.mxu0 0
    %120 = vmatpush1.bf16.msra.mxu0 0
    %121 = vmatprep.subr.bf16.mxu0 0
    %122 = vmatpush1.bf16.msra.mxu0 0
    %123 = vmatprep.subr.bf16.mxu0 0
    %124 = vmatpush1.bf16.msra.mxu0 0
    %125 = vmatprep.subr.bf16.mxu0 0
    %126 = vmatpush1.bf16.msra.mxu0 0
    %127 = vmatprep.subr.bf16.mxu0 0
    %128 = vmatpush1.bf16.msra.mxu0 0
    %129 = vmatprep.subr.bf16.mxu0 0
    %130 = vmatpush1.bf16.msra.mxu0 0
    %131 = vmatprep.subr.bf16.mxu0 0
    %132 = vmatpush1.bf16.msra.mxu0 0
    %133 = vmatprep.subr.bf16.mxu0 0
    %134 = vmatpush1.bf16.msra.mxu0 0
    %135 = vmatprep.subr.bf16.mxu0 0
    %136 = vmatpush1.bf16.msra.mxu0 0
    %137 = vmatprep.subr.bf16.mxu0 0
    %138 = vmatpush1.bf16.msra.mxu0 0
    %139 = vmatprep.mubr.bf16.mxu0 0
    %140 = vmatmul.mubr.bf16.gmra.mrb[0].mxu0 %v89
    %v141 = vpop.f32.mrb[0].mxu0
    %v142 = vadd.f32 %v49, %v141
    %v143 = vpop.f32.mrb[0].mxu0
    %v144 = vadd.f32 %v49, %v143
    %v145 = vpop.f32.mrb[0].mxu0
    %v146 = vpop.f32.mrb[0].mxu0
    %147 = vdwg.mxu0
    %148 = vmatprep.subr.bf16.mxu0 %v78
    %149 = vmatpush1.bf16.msra.mxu0 %v77
    %150 = vmatprep.subr.bf16.mxu0 %v105
    %151 = vmatpush1.bf16.msra.mxu0 %v102
    %152 = vmatprep.subr.bf16.mxu0 0
    %153 = vmatpush1.bf16.msra.mxu0 0
    %154 = vmatprep.subr.bf16.mxu0 0
    %155 = vmatpush1.bf16.msra.mxu0 0
    %156 = vmatprep.subr.bf16.mxu0 0
    %157 = vmatpush1.bf16.msra.mxu0 0
    %158 = vmatprep.subr.bf16.mxu0 0
    %159 = vmatpush1.bf16.msra.mxu0 0
    %160 = vmatprep.subr.bf16.mxu0 0
    %161 = vmatpush1.bf16.msra.mxu0 0
    %162 = vmatprep.subr.bf16.mxu0 0
    %163 = vmatpush1.bf16.msra.mxu0 0
    %164 = vmatprep.subr.bf16.mxu0 0
    %165 = vmatpush1.bf16.msra.mxu0 0
    %166 = vmatprep.subr.bf16.mxu0 0
    %167 = vmatpush1.bf16.msra.mxu0 0
    %168 = vmatprep.subr.bf16.mxu0 0
    %169 = vmatpush1.bf16.msra.mxu0 0
    %170 = vmatprep.subr.bf16.mxu0 0
    %171 = vmatpush1.bf16.msra.mxu0 0
    %172 = vmatprep.subr.bf16.mxu0 0
    %173 = vmatpush1.bf16.msra.mxu0 0
    %174 = vmatprep.subr.bf16.mxu0 0
    %175 = vmatpush1.bf16.msra.mxu0 0
    %176 = vmatprep.subr.bf16.mxu0 0
    %177 = vmatpush1.bf16.msra.mxu0 0
    %178 = vmatprep.subr.bf16.mxu0 0
    %179 = vmatpush1.bf16.msra.mxu0 0
    %180 = vmatprep.mubr.bf16.mxu0 0
    %181 = vmatmul.mubr.bf16.gmra.mrb[0].mxu0 %v89
    %v182 = vpop.f32.mrb[0].mxu0
    %v183 = vadd.f32 %v49, %v182
    %v184 = vpop.f32.mrb[0].mxu0
    %v185 = vadd.f32 %v49, %v184
    %v186 = vpop.f32.mrb[0].mxu0
    %v187 = vpop.f32.mrb[0].mxu0
    %188 = vdwg.mxu0
    %v189 = vadd.f32 %v142, %v144
    %v190 = vadd.f32 %v189, %v183
    %v191 = vadd.f32 %v190, %v185
    %192 = vadd.xlane.f32.xlu0 %v191
    %v193 = vpop.xlane.xlu0 %192
    %v194 = vrcp.pop 512.0
    %v195 = vmul.f32 %v193, %v194
    %v196 = vsub.f32 %v142, %v195
    %v197 = vsub.f32 %v144, %v195
    %v198 = vsub.f32 %v183, %v195
    %v199 = vsub.f32 %v185, %v195
    %v200 = vmul.f32 %v196, %v196
    %v201 = vmul.f32 %v197, %v197
    %v202 = vmul.f32 %v198, %v198
    %v203 = vmul.f32 %v199, %v199
    %v204 = vadd.f32 %v200, %v201
    %v205 = vadd.f32 %v204, %v202
    %v206 = vadd.f32 %v205, %v203
    %207 = vadd.xlane.f32.xlu0 %v206
    %v208 = vpop.xlane.xlu0 %207
    %v209 = vmul.f32 %v208, %v194
    %v210 = vld [vmem:[%s3] sm:$0xff]
    %v211 = vadd.f32 %v209, 1e-05
    %v212 = vrsqrt.pop %v211
    %v213 = vmul.f32 %v210, %v212
    %215 = vset.pattern.permute.xlu0 0
    %216 = vperm.xlu0 %215, %v213
    %v217 = vpop.permute.xlu0 %216
    %v219 = vmul.f32 %v196, %v217
    %v220 = vmul.f32 %v197, %v217
    %v221 = vmul.f32 %v198, %v217
    %v222 = vmul.f32 %v199, %v217
    %v223 = vld [vmem:[%s4] sm:$0xff]
    %225 = vset.pattern.permute.xlu0 0
    %226 = vperm.xlu0 %225, %v223
    %v227 = vpop.permute.xlu0 %226
    %v229 = vadd.f32 %v219, %v227
    %v230 = vadd.f32 %v220, %v227
    %v231 = vadd.f32 %v221, %v227
    %v232 = vadd.f32 %v222, %v227
    %v233 = vmax.f32 %v229, 0.0
    %v234 = vmax.f32 %v230, 0.0
    %v235 = vmax.f32 %v231, 0.0
    %v236 = vmax.f32 %v232, 0.0
    %237 = vst [vmem:[#allocation5] sm:$0xff] %v233
    %238 = vst [vmem:[#allocation5 + $0x8] sm:$0xff] %v234
    %239 = vst [vmem:[#allocation5 + $0x10] sm:$0xff] %v235
    %240 = vst [vmem:[#allocation5 + $0x18] sm:$0xff] %v236
    // Predicated region
    $region26: #{tpu_custom_call.1} parent=1 // pred_check
      _
    $region27: #{tpu_custom_call.1} parent=1 // pred_check_branch
      %242 = sbr.rel (0) target = $region29
    $region28: #{tpu_custom_call.1} parent=1 // pred_region
      %s244 = ssub.s32 512, 512
      %245 = vsyncadd [#allocation4], %s244
      %s247 = sshll.u32 [#allocation5], 4
      %s248 = int_to_ptr.vmem [resolvable:$true] %s247
      %250 = dma.vmem_to_hbm [thread:$0]  %s248, 512, %s5, [#allocation4]
    $region29: #{tpu_custom_call.1} parent=1 // pred_fallthru
      _
    // Predicated region
    $region30: #{tpu_custom_call.1} parent=1 // pred_check
      _
    $region31: #{tpu_custom_call.1} parent=1 // pred_check_branch
      %252 = sbr.rel (0) target = $region33
    $region32: #{tpu_custom_call.1} parent=1 // pred_region
      %253 = dma.done [#allocation4], 512
    $region33: #{tpu_custom_call.1} parent=1 // pred_fallthru
      _
    %254 = vsyncpa [#allocation3], 1
    %255 = vsyncpa [#allocation4], 1

</llo_original>
